<compile_context>
chip_gen: v5e
topology: v5e:2x2
jax: 0.10.0
libtpu: 0.0.40
codegen_flags: <defaults>
</compile_context>

<pallas_src>
import functools
import math
import random

import numpy as np

import jax
import jax.numpy as jnp
from jax.experimental import pallas as pl
from jax.experimental.pallas import tpu as pltpu


# ------------------------------------------------------------------ pre-pass kernel
def _pert_field_kernel(noise_ref, bh_ref, bwT_ref, grs_ref, gcs_ref, pert_ref,
                       *, num_bumps):
    """One-shot: blurred/scaled displacement * perturbation mask for the full image."""
    f32 = jnp.float32
    bh = bh_ref[...]                                   # (H, H)   alpha folded in
    bwT = bwT_ref[...]                                 # (W, W)   width blur, transposed
    dx = jnp.dot(jnp.dot(bh, noise_ref[0], preferred_element_type=f32), bwT,
                 preferred_element_type=f32)           # (H, W)
    dy = jnp.dot(jnp.dot(bh, noise_ref[1], preferred_element_type=f32), bwT,
                 preferred_element_type=f32)           # (H, W)

    # perturbation mask: sum of clamped Gaussian bumps (2/max folded into grs)
    acc = jnp.zeros(dx.shape, f32)
    for k in range(num_bumps):
        bump = grs_ref[:, pl.ds(k, 1)] * gcs_ref[pl.ds(k, 1), :]   # outer product (H, W)
        acc = acc + jnp.clip(bump, 0.0, 1.0)
    mask = jnp.clip(acc, 0.0, 1.0)

    pert_ref[0, :, :] = dx * mask
    pert_ref[1, :, :] = dy * mask


def _compute_pert_field(noise, bh_alpha, bwT, grs, gcs, H, W):
    nbr = int(gcs.shape[0])
    kernel = functools.partial(_pert_field_kernel, num_bumps=nbr)
    return pl.pallas_call(
        kernel,
        out_shape=jax.ShapeDtypeStruct((2, H, W), jnp.float32),
        grid=(1,),
        in_specs=[
            pl.BlockSpec((2, H, W), lambda i: (0, 0, 0)),
            pl.BlockSpec((H, H), lambda i: (0, 0)),
            pl.BlockSpec((W, W), lambda i: (0, 0)),
            pl.BlockSpec((H, nbr), lambda i: (0, 0)),
            pl.BlockSpec((nbr, W), lambda i: (0, 0)),
        ],
        out_specs=pl.BlockSpec((2, H, W), lambda i: (0, 0, 0)),
        compiler_params=pltpu.CompilerParams(dimension_semantics=("arbitrary",)),
    )(noise, bh_alpha, bwT, grs, gcs)


# ------------------------------------------------------------------ main warp kernel
def _elastic_warp_kernel(pert_ref, grid_ref, imgT_ref,
                         img_out_ref, flow_out_ref, mask_out_ref,
                         *, num_channels, full_h, full_w, block_rows):
    f32 = jnp.float32
    H, W = full_h, full_w
    N = block_rows * W                                 # flattened output pixels this block

    colf = grid_ref[pl.ds(0, 1), :]                    # (1, N) x of each output pixel
    rowf = grid_ref[pl.ds(1, 1), :]                    # (1, N) y of each output pixel
    dxm = pert_ref[pl.ds(0, 1), :]                     # (1, N) masked dx
    dym = pert_ref[pl.ds(1, 1), :]                     # (1, N) masked dy

    # ---- warp of the identity mapping (rank-1 sources -> closed form, pure VPU) -----
    sx1 = colf + dxm
    sy1 = rowf + dym
    swx1 = jnp.clip(jnp.minimum(sx1 + 1.0, float(W) - sx1), 0.0, 1.0)   # sum_j wx[j]
    swy1 = jnp.clip(jnp.minimum(sy1 + 1.0, float(H) - sy1), 0.0, 1.0)   # sum_i wy[i]
    map_x = swy1 * (jnp.clip(sx1, 0.0, float(W - 1)) * swx1)            # sum wy * sum j*wx
    map_y = (jnp.clip(sy1, 0.0, float(H - 1)) * swy1) * swx1            # sum i*wy * sum wx

    flow_x = map_x - colf                              # convert_mapping_to_flow
    flow_y = map_y - rowf
    flow_out_ref[pl.ds(0, 1), :] = flow_x
    flow_out_ref[pl.ds(1, 1), :] = flow_y

    # sample coordinates of the image warp: grid + flow_gt == warped mapping
    sx2 = map_x
    sy2 = map_y
    # TODO(synk): in-bounds test uses the closed interval [0, W-1]/[0, H-1]; adjust if the
    # reference warp's valid-mask convention is strict at the last pixel.
    inb = ((sx2 >= 0.0) & (sx2 <= float(W - 1)) &
           (sy2 >= 0.0) & (sy2 <= float(H - 1))).astype(f32)
    mask_out_ref[...] = inb

    # ---- bilinear image warp: one MXU matmul per channel over the whole block -------
    iota_h = jax.lax.broadcasted_iota(jnp.int32, (H, N), 0).astype(f32)
    iota_w = jax.lax.broadcasted_iota(jnp.int32, (W, N), 0).astype(f32)
    wy = jnp.maximum(0.0, 1.0 - jnp.abs(iota_h - sy2))                  # (H, N) tent weights
    wx = jnp.maximum(0.0, 1.0 - jnp.abs(iota_w - sx2))                  # (W, N)
    wy_bf = wy.astype(jnp.bfloat16)                    # bf16 MXU operands, f32 accumulation

    for c in range(num_channels):
        m = jnp.dot(imgT_ref[c], wy_bf, preferred_element_type=f32)     # (W, N)
        img_out_ref[pl.ds(c, 1), :] = jnp.sum(wx * m, axis=0, keepdims=True)


def _pick_block_rows(H, W):
    # biggest row block such that the flattened lane width is a multiple of 128
    for th in (32, 16, 8):
        if H % th == 0 and (th * W) % 128 == 0:
            return th
    return H  # single block: block dims == full dims, always legal


def _elastic_warp(pert_flat, grid_flat, imgT_bf16, H, W, C, block_rows):
    kernel = functools.partial(_elastic_warp_kernel, num_channels=C,
                               full_h=H, full_w=W, block_rows=block_rows)
    bn = block_rows * W
    out_shape = (
        jax.ShapeDtypeStruct((C, H * W), jnp.float32),   # warped image (flattened rows)
        jax.ShapeDtypeStruct((2, H * W), jnp.float32),   # flow_gt (flattened rows)
        jax.ShapeDtypeStruct((1, H * W), jnp.float32),   # warp validity mask
    )
    in_specs = [
        pl.BlockSpec((2, bn), lambda i: (0, i)),         # masked perturbation (row block)
        pl.BlockSpec((2, bn), lambda i: (0, i)),         # [x; y] pixel grid (row block)
        pl.BlockSpec((C, W, H), lambda i: (0, 0, 0)),    # image, pre-transposed, bf16 (full)
    ]
    out_specs = (
        pl.BlockSpec((C, bn), lambda i: (0, i)),
        pl.BlockSpec((2, bn), lambda i: (0, i)),
        pl.BlockSpec((1, bn), lambda i: (0, i)),
    )
    return pl.pallas_call(
        kernel,
        out_shape=out_shape,
        grid=(H // block_rows,),
        in_specs=in_specs,
        out_specs=out_specs,
        compiler_params=pltpu.CompilerParams(dimension_semantics=("parallel",)),
    )(pert_flat, grid_flat, imgT_bf16)


# ------------------------------------------------------------------ host glue
def _cv2_gaussian_kernel_1d(sigma):
    # TODO(synk): cv2.GaussianBlur((0,0), sigma) kernel-size heuristic for float images.
    ksize = int(round(sigma * 8.0 + 1.0)) | 1
    r = ksize // 2
    x = np.arange(ksize, dtype=np.float64) - r
    k = np.exp(-(x * x) / (2.0 * sigma * sigma))
    return k / k.sum(), r


def _reflect101_index(idx, n):
    idx = np.asarray(idx)
    if n == 1:
        return np.zeros_like(idx)
    period = 2 * (n - 1)
    idx = np.mod(idx, period)
    return np.where(idx >= n, period - idx, idx)


def _gaussian_blur_matrix(n, sigma):
    """Dense 1-D Gaussian-blur operator with reflect-101 border (cv2 default)."""
    k, r = _cv2_gaussian_kernel_1d(sigma)
    mat = np.zeros((n, n), dtype=np.float64)
    for out in range(n):
        src = _reflect101_index(np.arange(out - r, out + r + 1), n)
        np.add.at(mat[out], src, k)
    return mat.astype(np.float32)


def _gaussian_1d(m, mu, std):
    n = np.arange(m, dtype=np.float64)
    return np.exp(-((n - mu) ** 2) / (2.0 * std * std))


class RandomElasticPallas:
    """Pallas port of RandomElastic (flow=None, batch=1, apply_keys == ['image_prime'])."""

    def __init__(self, min_nbr_perturbations=5, max_nbr_perturbations=13,
                 min_sigma_mask=10, max_sigma_mask=40, min_sigma=0.1, max_sigma=0.08,
                 min_alpha=1, max_alpha=1, min_fraction_valid_corr=0.1, return_flow=False):
        self.min_nbr_perturbations = min_nbr_perturbations
        self.max_nbr_perturbations = max_nbr_perturbations
        self.min_sigma_mask = min_sigma_mask
        self.max_sigma_mask = max_sigma_mask
        self.min_sigma = min_sigma
        self.max_sigma = max_sigma
        self.min_alpha = min_alpha
        self.max_alpha = max_alpha
        self.min_fraction_valid_corr = min_fraction_valid_corr
        self.return_flow = return_flow

    def __call__(self, sample, noise_key, seed=0):
        image = jnp.asarray(sample["image_prime"], dtype=jnp.float32)
        C, H, W = image.shape

        # TODO(synk): python `random` draws of the reference are replaced by a seeded
        # deterministic host RNG (same ranges / same usage pattern).
        rng = random.Random(seed)
        nbr = rng.randint(self.min_nbr_perturbations, self.max_nbr_perturbations)
        sigma_blur = max(H, W) * (self.min_sigma + self.max_sigma * rng.random())
        alpha = max(H, W) * (self.min_alpha + self.max_alpha * rng.random())

        grs = np.zeros((H, nbr), dtype=np.float32)   # per-bump row factors (H axis)
        gcs = np.zeros((nbr, W), dtype=np.float32)   # per-bump col factors (W axis)
        for k in range(nbr):
            sig = rng.randint(self.min_sigma_mask, self.max_sigma_mask)
            if 3 * sig > min(H, W) - 3 * sig:
                # TODO(synk): reference assumes large images; clamp sigma so the
                # center-sampling range stays valid at this small synthetic size.
                sig = self.min_sigma_mask
            x = rng.randint(3 * sig, W - 3 * sig)    # width-range center
            y = rng.randint(3 * sig, H - 3 * sig)    # height-range center
            g1 = _gaussian_1d(H, x, sig)             # gkern uses mu=[x, y] exactly as written
            g2 = _gaussian_1d(W, y, sig)
            div = sig * math.sqrt(2.0 * math.pi) ** 2
            m = g1.max() * g2.max() / div            # == outer(g1, g2).max() / div
            if m < 1e-6:
                continue
            grs[:, k] = (g1 / div) * (2.0 / m)       # fold the 2/max normalisation in
            gcs[k, :] = g2

        bh_alpha = (_gaussian_blur_matrix(H, sigma_blur) * alpha).astype(np.float32)
        bwT = _gaussian_blur_matrix(W, sigma_blur).T.astype(np.float32)

        # U[-1, 1) noise fields for dx / dy (torch.rand * 2 - 1 analogue)
        noise = jax.random.uniform(noise_key, (2, H, W), dtype=jnp.float32) * 2.0 - 1.0

        # one-shot pre-pass: masked perturbation field (dx*mask, dy*mask)
        pert = _compute_pert_field(noise, jnp.asarray(bh_alpha), jnp.asarray(bwT),
                                   jnp.asarray(grs), jnp.asarray(gcs), H, W)
        pert_flat = pert.reshape(2, H * W)

        # flattened pixel grid [x; y] (constant, built on host)
        cols = np.tile(np.arange(W, dtype=np.float32), H)
        rows = np.repeat(np.arange(H, dtype=np.float32), W)
        grid_flat = jnp.asarray(np.stack([cols, rows], axis=0))

        # image pre-transposed to (C, W, H); bf16 MXU operands for the warp, f32 accumulate
        imgT = jnp.transpose(image, (0, 2, 1)).astype(jnp.bfloat16)

        th = _pick_block_rows(H, W)
        img_flat, flow_flat, mask_flat = _elastic_warp(
            pert_flat, grid_flat, imgT, H, W, C, th)

        img_p = img_flat.reshape(C, H, W)
        flow_gt = flow_flat.reshape(2, H, W)
        mask_warp = mask_flat.reshape(H, W)

        if self.return_flow:
            return flow_gt

        # apply_transform fallback: too few valid correspondences -> use border mask.
        # TODO(synk): create_border_mask source not available; border mask approximated by
        # the warp in-bounds mask, so the fallback selection is degenerate (same mask).
        thresh = H * W * self.min_fraction_valid_corr
        use_border = jnp.sum(mask_warp) < thresh
        final_mask = jnp.where(use_border, mask_warp, mask_warp) > 0.5

        out = dict(sample)
        out["image_prime"] = img_p
        out["image_prime_flow"] = flow_gt
        out["image_prime_mask"] = final_mask
        return out


# ------------------------------------------------------------------ main
if __name__ == "__main__":
    C, H, W = 3, 64, 64
    key = jax.random.PRNGKey(0)
    k_img, k_noise = jax.random.split(key)
    image = jax.random.uniform(k_img, (C, H, W), dtype=jnp.float32)

    sample = {"image_prime": image}
    module = RandomElasticPallas()
    out = module(sample, noise_key=k_noise, seed=0)

    jax.block_until_ready(out["image_prime"])
    jax.block_until_ready(out["image_prime_flow"])
    jax.block_until_ready(out["image_prime_mask"])

    assert out["image_prime"].shape == (C, H, W)
    assert out["image_prime_flow"].shape == (2, H, W)
    assert out["image_prime_mask"].shape == (H, W)
    assert bool(jnp.all(jnp.isfinite(out["image_prime"])))
    assert bool(jnp.all(jnp.isfinite(out["image_prime_flow"])))

    print("KERNEL_OK")
</pallas_src>

<mosaic_0001>
module attributes {stable_mosaic.version = 11 : i64} {
  func.func @_pert_field_kernel(%arg0: i32, %arg1: memref<2x64x64xf32, #tpu.memory_space<vmem>>, %arg2: memref<64x64xf32, #tpu.memory_space<vmem>>, %arg3: memref<64x64xf32, #tpu.memory_space<vmem>>, %arg4: memref<64x11xf32, #tpu.memory_space<vmem>>, %arg5: memref<11x64xf32, #tpu.memory_space<vmem>>, %arg6: memref<2x64x64xf32, #tpu.memory_space<vmem>>) attributes {dimension_semantics = [#tpu.dimension_semantics<arbitrary>], iteration_bounds = array<i64: 1>, scalar_prefetch = 0 : i64, scratch_operands = 0 : i64, tpu.core_type = #tpu.core_type<tc>, window_params = [{pipeline_mode = #tpu.pipeline_mode<synchronous>, transform_indices = @transform_0, window_bounds = array<i64: 2, 64, 64>}, {pipeline_mode = #tpu.pipeline_mode<synchronous>, transform_indices = @transform_1, window_bounds = array<i64: 64, 64>}, {pipeline_mode = #tpu.pipeline_mode<synchronous>, transform_indices = @transform_2, window_bounds = array<i64: 64, 64>}, {pipeline_mode = #tpu.pipeline_mode<synchronous>, transform_indices = @transform_3, window_bounds = array<i64: 64, 11>}, {pipeline_mode = #tpu.pipeline_mode<synchronous>, transform_indices = @transform_4, window_bounds = array<i64: 11, 64>}, {pipeline_mode = #tpu.pipeline_mode<synchronous>, transform_indices = @transform_5, window_bounds = array<i64: 2, 64, 64>}]} {
    %c0 = arith.constant 0 : index
    %c0_0 = arith.constant 0 : index
    %0 = vector.load %arg2[%c0, %c0_0] : memref<64x64xf32, #tpu.memory_space<vmem>>, vector<64x64xf32>
    %c0_1 = arith.constant 0 : index
    %c0_2 = arith.constant 0 : index
    %1 = vector.load %arg3[%c0_1, %c0_2] : memref<64x64xf32, #tpu.memory_space<vmem>>, vector<64x64xf32>
    %c0_3 = arith.constant 0 : index
    %c0_4 = arith.constant 0 : index
    %c0_5 = arith.constant 0 : index
    %2 = vector.load %arg1[%c0_3, %c0_4, %c0_5] : memref<2x64x64xf32, #tpu.memory_space<vmem>>, vector<1x64x64xf32>
    %3 = vector.shape_cast %2 : vector<1x64x64xf32> to vector<64x64xf32>
    %cst = arith.constant dense<0.000000e+00> : vector<64x64xf32>
    %4 = tpu.matmul %0, %3, %cst {dimension_numbers = #tpu.dot_dimension_numbers<[1], [0], [0], [1], [0, 0, 1, 1], [], []>} : vector<64x64xf32>, vector<64x64xf32>, vector<64x64xf32> -> vector<64x64xf32>
    %cst_6 = arith.constant dense<0.000000e+00> : vector<64x64xf32>
    %5 = tpu.matmul %4, %1, %cst_6 {dimension_numbers = #tpu.dot_dimension_numbers<[1], [0], [0], [1], [0, 0, 1, 1], [], []>} : vector<64x64xf32>, vector<64x64xf32>, vector<64x64xf32> -> vector<64x64xf32>
    %c1 = arith.constant 1 : index
    %c0_7 = arith.constant 0 : index
    %c0_8 = arith.constant 0 : index
    %6 = vector.load %arg1[%c1, %c0_7, %c0_8] : memref<2x64x64xf32, #tpu.memory_space<vmem>>, vector<1x64x64xf32>
    %7 = vector.shape_cast %6 : vector<1x64x64xf32> to vector<64x64xf32>
    %cst_9 = arith.constant dense<0.000000e+00> : vector<64x64xf32>
    %8 = tpu.matmul %0, %7, %cst_9 {dimension_numbers = #tpu.dot_dimension_numbers<[1], [0], [0], [1], [0, 0, 1, 1], [], []>} : vector<64x64xf32>, vector<64x64xf32>, vector<64x64xf32> -> vector<64x64xf32>
    %cst_10 = arith.constant dense<0.000000e+00> : vector<64x64xf32>
    %9 = tpu.matmul %8, %1, %cst_10 {dimension_numbers = #tpu.dot_dimension_numbers<[1], [0], [0], [1], [0, 0, 1, 1], [], []>} : vector<64x64xf32>, vector<64x64xf32>, vector<64x64xf32> -> vector<64x64xf32>
    %cst_11 = arith.constant 0.000000e+00 : f32
    %10 = vector.broadcast %cst_11 : f32 to vector<64x64xf32>
    %c0_12 = arith.constant 0 : index
    %c0_13 = arith.constant 0 : index
    %11 = vector.load %arg4[%c0_12, %c0_13] : memref<64x11xf32, #tpu.memory_space<vmem>>, vector<64x1xf32>
    %c0_14 = arith.constant 0 : index
    %c0_15 = arith.constant 0 : index
    %12 = vector.load %arg5[%c0_14, %c0_15] : memref<11x64xf32, #tpu.memory_space<vmem>>, vector<1x64xf32>
    %13 = vector.broadcast %11 : vector<64x1xf32> to vector<64x64xf32>
    %14 = vector.broadcast %12 : vector<1x64xf32> to vector<64x64xf32>
    %15 = arith.mulf %13, %14 : vector<64x64xf32>
    %cst_16 = arith.constant 0.000000e+00 : f32
    %cst_17 = arith.constant 1.000000e+00 : f32
    %16 = vector.broadcast %cst_16 : f32 to vector<64x64xf32>
    %17 = arith.maximumf %16, %15 : vector<64x64xf32>
    %18 = vector.broadcast %cst_17 : f32 to vector<64x64xf32>
    %19 = arith.minimumf %18, %17 : vector<64x64xf32>
    %20 = arith.addf %10, %19 : vector<64x64xf32>
    %c0_18 = arith.constant 0 : index
    %c1_19 = arith.constant 1 : index
    %21 = vector.load %arg4[%c0_18, %c1_19] : memref<64x11xf32, #tpu.memory_space<vmem>>, vector<64x1xf32>
    %c1_20 = arith.constant 1 : index
    %c0_21 = arith.constant 0 : index
    %22 = vector.load %arg5[%c1_20, %c0_21] : memref<11x64xf32, #tpu.memory_space<vmem>>, vector<1x64xf32>
    %23 = vector.broadcast %21 : vector<64x1xf32> to vector<64x64xf32>
    %24 = vector.broadcast %22 : vector<1x64xf32> to vector<64x64xf32>
    %25 = arith.mulf %23, %24 : vector<64x64xf32>
    %cst_22 = arith.constant 0.000000e+00 : f32
    %cst_23 = arith.constant 1.000000e+00 : f32
    %26 = vector.broadcast %cst_22 : f32 to vector<64x64xf32>
    %27 = arith.maximumf %26, %25 : vector<64x64xf32>
    %28 = vector.broadcast %cst_23 : f32 to vector<64x64xf32>
    %29 = arith.minimumf %28, %27 : vector<64x64xf32>
    %30 = arith.addf %20, %29 : vector<64x64xf32>
    %c0_24 = arith.constant 0 : index
    %c2 = arith.constant 2 : index
    %31 = vector.load %arg4[%c0_24, %c2] : memref<64x11xf32, #tpu.memory_space<vmem>>, vector<64x1xf32>
    %c2_25 = arith.constant 2 : index
    %c0_26 = arith.constant 0 : index
    %32 = vector.load %arg5[%c2_25, %c0_26] : memref<11x64xf32, #tpu.memory_space<vmem>>, vector<1x64xf32>
    %33 = vector.broadcast %31 : vector<64x1xf32> to vector<64x64xf32>
    %34 = vector.broadcast %32 : vector<1x64xf32> to vector<64x64xf32>
    %35 = arith.mulf %33, %34 : vector<64x64xf32>
    %cst_27 = arith.constant 0.000000e+00 : f32
    %cst_28 = arith.constant 1.000000e+00 : f32
    %36 = vector.broadcast %cst_27 : f32 to vector<64x64xf32>
    %37 = arith.maximumf %36, %35 : vector<64x64xf32>
    %38 = vector.broadcast %cst_28 : f32 to vector<64x64xf32>
    %39 = arith.minimumf %38, %37 : vector<64x64xf32>
    %40 = arith.addf %30, %39 : vector<64x64xf32>
    %c0_29 = arith.constant 0 : index
    %c3 = arith.constant 3 : index
    %41 = vector.load %arg4[%c0_29, %c3] : memref<64x11xf32, #tpu.memory_space<vmem>>, vector<64x1xf32>
    %c3_30 = arith.constant 3 : index
    %c0_31 = arith.constant 0 : index
    %42 = vector.load %arg5[%c3_30, %c0_31] : memref<11x64xf32, #tpu.memory_space<vmem>>, vector<1x64xf32>
    %43 = vector.broadcast %41 : vector<64x1xf32> to vector<64x64xf32>
    %44 = vector.broadcast %42 : vector<1x64xf32> to vector<64x64xf32>
    %45 = arith.mulf %43, %44 : vector<64x64xf32>
    %cst_32 = arith.constant 0.000000e+00 : f32
    %cst_33 = arith.constant 1.000000e+00 : f32
    %46 = vector.broadcast %cst_32 : f32 to vector<64x64xf32>
    %47 = arith.maximumf %46, %45 : vector<64x64xf32>
    %48 = vector.broadcast %cst_33 : f32 to vector<64x64xf32>
    %49 = arith.minimumf %48, %47 : vector<64x64xf32>
    %50 = arith.addf %40, %49 : vector<64x64xf32>
    %c0_34 = arith.constant 0 : index
    %c4 = arith.constant 4 : index
    %51 = vector.load %arg4[%c0_34, %c4] : memref<64x11xf32, #tpu.memory_space<vmem>>, vector<64x1xf32>
    %c4_35 = arith.constant 4 : index
    %c0_36 = arith.constant 0 : index
    %52 = vector.load %arg5[%c4_35, %c0_36] : memref<11x64xf32, #tpu.memory_space<vmem>>, vector<1x64xf32>
    %53 = vector.broadcast %51 : vector<64x1xf32> to vector<64x64xf32>
    %54 = vector.broadcast %52 : vector<1x64xf32> to vector<64x64xf32>
    %55 = arith.mulf %53, %54 : vector<64x64xf32>
    %cst_37 = arith.constant 0.000000e+00 : f32
    %cst_38 = arith.constant 1.000000e+00 : f32
    %56 = vector.broadcast %cst_37 : f32 to vector<64x64xf32>
    %57 = arith.maximumf %56, %55 : vector<64x64xf32>
    %58 = vector.broadcast %cst_38 : f32 to vector<64x64xf32>
    %59 = arith.minimumf %58, %57 : vector<64x64xf32>
    %60 = arith.addf %50, %59 : vector<64x64xf32>
    %c0_39 = arith.constant 0 : index
    %c5 = arith.constant 5 : index
    %61 = vector.load %arg4[%c0_39, %c5] : memref<64x11xf32, #tpu.memory_space<vmem>>, vector<64x1xf32>
    %c5_40 = arith.constant 5 : index
    %c0_41 = arith.constant 0 : index
    %62 = vector.load %arg5[%c5_40, %c0_41] : memref<11x64xf32, #tpu.memory_space<vmem>>, vector<1x64xf32>
    %63 = vector.broadcast %61 : vector<64x1xf32> to vector<64x64xf32>
    %64 = vector.broadcast %62 : vector<1x64xf32> to vector<64x64xf32>
    %65 = arith.mulf %63, %64 : vector<64x64xf32>
    %cst_42 = arith.constant 0.000000e+00 : f32
    %cst_43 = arith.constant 1.000000e+00 : f32
    %66 = vector.broadcast %cst_42 : f32 to vector<64x64xf32>
    %67 = arith.maximumf %66, %65 : vector<64x64xf32>
    %68 = vector.broadcast %cst_43 : f32 to vector<64x64xf32>
    %69 = arith.minimumf %68, %67 : vector<64x64xf32>
    %70 = arith.addf %60, %69 : vector<64x64xf32>
    %c0_44 = arith.constant 0 : index
    %c6 = arith.constant 6 : index
    %71 = vector.load %arg4[%c0_44, %c6] : memref<64x11xf32, #tpu.memory_space<vmem>>, vector<64x1xf32>
    %c6_45 = arith.constant 6 : index
    %c0_46 = arith.constant 0 : index
    %72 = vector.load %arg5[%c6_45, %c0_46] : memref<11x64xf32, #tpu.memory_space<vmem>>, vector<1x64xf32>
    %73 = vector.broadcast %71 : vector<64x1xf32> to vector<64x64xf32>
    %74 = vector.broadcast %72 : vector<1x64xf32> to vector<64x64xf32>
    %75 = arith.mulf %73, %74 : vector<64x64xf32>
    %cst_47 = arith.constant 0.000000e+00 : f32
    %cst_48 = arith.constant 1.000000e+00 : f32
    %76 = vector.broadcast %cst_47 : f32 to vector<64x64xf32>
    %77 = arith.maximumf %76, %75 : vector<64x64xf32>
    %78 = vector.broadcast %cst_48 : f32 to vector<64x64xf32>
    %79 = arith.minimumf %78, %77 : vector<64x64xf32>
    %80 = arith.addf %70, %79 : vector<64x64xf32>
    %c0_49 = arith.constant 0 : index
    %c7 = arith.constant 7 : index
    %81 = vector.load %arg4[%c0_49, %c7] : memref<64x11xf32, #tpu.memory_space<vmem>>, vector<64x1xf32>
    %c7_50 = arith.constant 7 : index
    %c0_51 = arith.constant 0 : index
    %82 = vector.load %arg5[%c7_50, %c0_51] : memref<11x64xf32, #tpu.memory_space<vmem>>, vector<1x64xf32>
    %83 = vector.broadcast %81 : vector<64x1xf32> to vector<64x64xf32>
    %84 = vector.broadcast %82 : vector<1x64xf32> to vector<64x64xf32>
    %85 = arith.mulf %83, %84 : vector<64x64xf32>
    %cst_52 = arith.constant 0.000000e+00 : f32
    %cst_53 = arith.constant 1.000000e+00 : f32
    %86 = vector.broadcast %cst_52 : f32 to vector<64x64xf32>
    %87 = arith.maximumf %86, %85 : vector<64x64xf32>
    %88 = vector.broadcast %cst_53 : f32 to vector<64x64xf32>
    %89 = arith.minimumf %88, %87 : vector<64x64xf32>
    %90 = arith.addf %80, %89 : vector<64x64xf32>
    %c0_54 = arith.constant 0 : index
    %c8 = arith.constant 8 : index
    %91 = vector.load %arg4[%c0_54, %c8] : memref<64x11xf32, #tpu.memory_space<vmem>>, vector<64x1xf32>
    %c8_55 = arith.constant 8 : index
    %c0_56 = arith.constant 0 : index
    %92 = vector.load %arg5[%c8_55, %c0_56] : memref<11x64xf32, #tpu.memory_space<vmem>>, vector<1x64xf32>
    %93 = vector.broadcast %91 : vector<64x1xf32> to vector<64x64xf32>
    %94 = vector.broadcast %92 : vector<1x64xf32> to vector<64x64xf32>
    %95 = arith.mulf %93, %94 : vector<64x64xf32>
    %cst_57 = arith.constant 0.000000e+00 : f32
    %cst_58 = arith.constant 1.000000e+00 : f32
    %96 = vector.broadcast %cst_57 : f32 to vector<64x64xf32>
    %97 = arith.maximumf %96, %95 : vector<64x64xf32>
    %98 = vector.broadcast %cst_58 : f32 to vector<64x64xf32>
    %99 = arith.minimumf %98, %97 : vector<64x64xf32>
    %100 = arith.addf %90, %99 : vector<64x64xf32>
    %c0_59 = arith.constant 0 : index
    %c9 = arith.constant 9 : index
    %101 = vector.load %arg4[%c0_59, %c9] : memref<64x11xf32, #tpu.memory_space<vmem>>, vector<64x1xf32>
    %c9_60 = arith.constant 9 : index
    %c0_61 = arith.constant 0 : index
    %102 = vector.load %arg5[%c9_60, %c0_61] : memref<11x64xf32, #tpu.memory_space<vmem>>, vector<1x64xf32>
    %103 = vector.broadcast %101 : vector<64x1xf32> to vector<64x64xf32>
    %104 = vector.broadcast %102 : vector<1x64xf32> to vector<64x64xf32>
    %105 = arith.mulf %103, %104 : vector<64x64xf32>
    %cst_62 = arith.constant 0.000000e+00 : f32
    %cst_63 = arith.constant 1.000000e+00 : f32
    %106 = vector.broadcast %cst_62 : f32 to vector<64x64xf32>
    %107 = arith.maximumf %106, %105 : vector<64x64xf32>
    %108 = vector.broadcast %cst_63 : f32 to vector<64x64xf32>
    %109 = arith.minimumf %108, %107 : vector<64x64xf32>
    %110 = arith.addf %100, %109 : vector<64x64xf32>
    %c0_64 = arith.constant 0 : index
    %c10 = arith.constant 10 : index
    %111 = vector.load %arg4[%c0_64, %c10] : memref<64x11xf32, #tpu.memory_space<vmem>>, vector<64x1xf32>
    %c10_65 = arith.constant 10 : index
    %c0_66 = arith.constant 0 : index
    %112 = vector.load %arg5[%c10_65, %c0_66] : memref<11x64xf32, #tpu.memory_space<vmem>>, vector<1x64xf32>
    %113 = vector.broadcast %111 : vector<64x1xf32> to vector<64x64xf32>
    %114 = vector.broadcast %112 : vector<1x64xf32> to vector<64x64xf32>
    %115 = arith.mulf %113, %114 : vector<64x64xf32>
    %cst_67 = arith.constant 0.000000e+00 : f32
    %cst_68 = arith.constant 1.000000e+00 : f32
    %116 = vector.broadcast %cst_67 : f32 to vector<64x64xf32>
    %117 = arith.maximumf %116, %115 : vector<64x64xf32>
    %118 = vector.broadcast %cst_68 : f32 to vector<64x64xf32>
    %119 = arith.minimumf %118, %117 : vector<64x64xf32>
    %120 = arith.addf %110, %119 : vector<64x64xf32>
    %cst_69 = arith.constant 0.000000e+00 : f32
    %cst_70 = arith.constant 1.000000e+00 : f32
    %121 = vector.broadcast %cst_69 : f32 to vector<64x64xf32>
    %122 = arith.maximumf %121, %120 : vector<64x64xf32>
    %123 = vector.broadcast %cst_70 : f32 to vector<64x64xf32>
    %124 = arith.minimumf %123, %122 : vector<64x64xf32>
    %125 = arith.mulf %5, %124 : vector<64x64xf32>
    %c0_71 = arith.constant 0 : index
    %c0_72 = arith.constant 0 : index
    %c0_73 = arith.constant 0 : index
    %126 = vector.load %arg6[%c0_71, %c0_72, %c0_73] : memref<2x64x64xf32, #tpu.memory_space<vmem>>, vector<1x64x64xf32>
    %127 = vector.shape_cast %126 : vector<1x64x64xf32> to vector<64x64xf32>
    %128 = vector.shape_cast %125 : vector<64x64xf32> to vector<1x64x64xf32>
    tpu.vector_store %arg6[%c0_71, %c0_72, %c0_73], %128 {strides = array<i32>} : memref<2x64x64xf32, #tpu.memory_space<vmem>>, vector<1x64x64xf32>,
    %129 = arith.mulf %9, %124 : vector<64x64xf32>
    %c1_74 = arith.constant 1 : index
    %c0_75 = arith.constant 0 : index
    %c0_76 = arith.constant 0 : index
    %130 = vector.load %arg6[%c1_74, %c0_75, %c0_76] : memref<2x64x64xf32, #tpu.memory_space<vmem>>, vector<1x64x64xf32>
    %131 = vector.shape_cast %130 : vector<1x64x64xf32> to vector<64x64xf32>
    %132 = vector.shape_cast %129 : vector<64x64xf32> to vector<1x64x64xf32>
    tpu.vector_store %arg6[%c1_74, %c0_75, %c0_76], %132 {strides = array<i32>} : memref<2x64x64xf32, #tpu.memory_space<vmem>>, vector<1x64x64xf32>,
    return
  }
  func.func @transform_0(%arg0: i32) -> (i32, i32, i32) {
    %c0_i32 = arith.constant 0 : i32
    %c0_i32_0 = arith.constant 0 : i32
    %c0_i32_1 = arith.constant 0 : i32
    %c0_i32_2 = arith.constant 0 : i32
    return %c0_i32, %c0_i32_0, %c0_i32_1 : i32, i32, i32
  }
  func.func @transform_1(%arg0: i32) -> (i32, i32) {
    %c0_i32 = arith.constant 0 : i32
    %c0_i32_0 = arith.constant 0 : i32
    %c0_i32_1 = arith.constant 0 : i32
    return %c0_i32, %c0_i32_0 : i32, i32
  }
  func.func @transform_2(%arg0: i32) -> (i32, i32) {
    %c0_i32 = arith.constant 0 : i32
    %c0_i32_0 = arith.constant 0 : i32
    %c0_i32_1 = arith.constant 0 : i32
    return %c0_i32, %c0_i32_0 : i32, i32
  }
  func.func @transform_3(%arg0: i32) -> (i32, i32) {
    %c0_i32 = arith.constant 0 : i32
    %c0_i32_0 = arith.constant 0 : i32
    %c0_i32_1 = arith.constant 0 : i32
    return %c0_i32, %c0_i32_0 : i32, i32
  }
  func.func @transform_4(%arg0: i32) -> (i32, i32) {
    %c0_i32 = arith.constant 0 : i32
    %c0_i32_0 = arith.constant 0 : i32
    %c0_i32_1 = arith.constant 0 : i32
    return %c0_i32, %c0_i32_0 : i32, i32
  }
  func.func @transform_5(%arg0: i32) -> (i32, i32, i32) {
    %c0_i32 = arith.constant 0 : i32
    %c0_i32_0 = arith.constant 0 : i32
    %c0_i32_1 = arith.constant 0 : i32
    %c0_i32_2 = arith.constant 0 : i32
    return %c0_i32, %c0_i32_0, %c0_i32_1 : i32, i32, i32
  }
}

</mosaic_0001>

<llo_original>
// kernel: tpu_custom_call.1
$region0: #{tpu_custom_call.1}
  #allocation0 [shape = 'u32[]', space=smem, size = 0x4, offset = 0x4, fixed_abs, tag = 'smem constant byte address 0x4 - core index']
  #allocation1 [shape = 'u32[72,128]{1,0:T(1,128)}', space=vmem, size = 0x9000, scoped, tag = 'internal scratch']
  %s0 = inlined_call_operand.hbm [shape: f32[2,64,64], index: 0, kind: input, shape index: {}]
  %s1 = inlined_call_operand.vmem [shape: f32[64,64], index: 1, kind: input, shape index: {}]
  %s2 = inlined_call_operand.hbm [shape: f32[64,64], index: 2, kind: input, shape index: {}]
  %s3 = inlined_call_operand.vmem [shape: f32[64,11], index: 3, kind: input, shape index: {}]
  %s4 = inlined_call_operand.vmem [shape: f32[11,64], index: 4, kind: input, shape index: {}]
  %s5 = inlined_call_operand.hbm [shape: f32[2,64,64], index: 5, kind: output, shape index: {}]
  %s6 = sld [smem:[#allocation0]]
  $region38: #{tpu_custom_call.1} parent=0
    _
  %s8 = ssub.s32 1, %s6
  %s9 = scalar_select 0, %s8, %s6
  $region1: #{tpu_custom_call.1} parent=0
    #allocation2 [shape = 'u8[65536]{0}', space=vmem, size = 0x10000, scoped, tag = 'input window, operand 0, single buffered']
    #allocation3 [shape = 's32[1]{0}', space=sflag, size = 0x4, scoped, tag = 'scoped memory for tpu_custom_call.1']
    #allocation4 [shape = 's32[1]{0}', space=sflag, size = 0x4, scoped, tag = 'scoped memory for tpu_custom_call.1']
    #allocation5 [shape = 'u8[32768]{0}', space=vmem, size = 0x8000, scoped, tag = 'input window, operand 2, single buffered']
    #allocation6 [shape = 's32[1]{0}', space=sflag, size = 0x4, scoped, tag = 'scoped memory for tpu_custom_call.1']
    #allocation7 [shape = 'u8[65536]{0}', space=vmem, size = 0x10000, scoped, tag = 'output window, operand 0, single buffered']
    %10 = vsyncpa [#allocation3], 0
    %11 = vsyncpa [#allocation6], 0
    %12 = vsyncpa [#allocation4], 0
    // Predicated region
    $region2: #{tpu_custom_call.1} parent=1 // pred_check
      _
    $region3: #{tpu_custom_call.1} parent=1 // pred_check_branch
      %14 = sbr.rel (0) target = $region5
    $region4: #{tpu_custom_call.1} parent=1 // pred_region
      %16 = vsyncadd [#allocation3], 0
      %s17 = sshll.u32 %s0, 4
      %s18 = int_to_ptr.hbm [resolvable:$true] %s17
      %s19 = sshll.u32 [#allocation2], 4
      %s20 = int_to_ptr.vmem [resolvable:$true] %s19
      %25 = dma.hbm_to_vmem [thread:$0]  %s18, 2048, %s20, [#allocation3], 128, 128, 8
    $region5: #{tpu_custom_call.1} parent=1 // pred_fallthru
      _
    // Predicated region
    $region6: #{tpu_custom_call.1} parent=1 // pred_check
      _
    $region7: #{tpu_custom_call.1} parent=1 // pred_check_branch
      %27 = sbr.rel (0) target = $region9
    $region8: #{tpu_custom_call.1} parent=1 // pred_region
      _
    $region9: #{tpu_custom_call.1} parent=1 // pred_fallthru
      _
    // Predicated region
    $region10: #{tpu_custom_call.1} parent=1 // pred_check
      _
    $region11: #{tpu_custom_call.1} parent=1 // pred_check_branch
      %29 = sbr.rel (0) target = $region13
    $region12: #{tpu_custom_call.1} parent=1 // pred_region
      %31 = vsyncadd [#allocation6], 0
      %s32 = sshll.u32 %s2, 4
      %s33 = int_to_ptr.hbm [resolvable:$true] %s32
      %s34 = sshll.u32 [#allocation5], 4
      %s35 = int_to_ptr.vmem [resolvable:$true] %s34
      %40 = dma.hbm_to_vmem [thread:$0]  %s33, 1024, %s35, [#allocation6], 128, 128, 8
    $region13: #{tpu_custom_call.1} parent=1 // pred_fallthru
      _
    // Predicated region
    $region14: #{tpu_custom_call.1} parent=1 // pred_check
      _
    $region15: #{tpu_custom_call.1} parent=1 // pred_check_branch
      %42 = sbr.rel (0) target = $region17
    $region16: #{tpu_custom_call.1} parent=1 // pred_region
      _
    $region17: #{tpu_custom_call.1} parent=1 // pred_fallthru
      _
    // Predicated region
    $region18: #{tpu_custom_call.1} parent=1 // pred_check
      _
    $region19: #{tpu_custom_call.1} parent=1 // pred_check_branch
      %44 = sbr.rel (0) target = $region21
    $region20: #{tpu_custom_call.1} parent=1 // pred_region
      _
    $region21: #{tpu_custom_call.1} parent=1 // pred_fallthru
      _
    // Predicated region
    $region22: #{tpu_custom_call.1} parent=1 // pred_check
      _
    $region23: #{tpu_custom_call.1} parent=1 // pred_check_branch
      %46 = sbr.rel (0) target = $region25
    $region24: #{tpu_custom_call.1} parent=1 // pred_region
      %48 = dma.done [#allocation3], 2048
    $region25: #{tpu_custom_call.1} parent=1 // pred_fallthru
      _
    // Predicated region
    $region26: #{tpu_custom_call.1} parent=1 // pred_check
      _
    $region27: #{tpu_custom_call.1} parent=1 // pred_check_branch
      %50 = sbr.rel (0) target = $region29
    $region28: #{tpu_custom_call.1} parent=1 // pred_region
      %52 = dma.done [#allocation6], 1024
    $region29: #{tpu_custom_call.1} parent=1 // pred_fallthru
      _
    %v53 = vld [vmem:[%s1] sm:$0xff]
    %v54 = vld [vmem:[%s1 + $0x8] sm:$0xff]
    %v55 = vld [vmem:[%s1 + $0x10] sm:$0xff]
    %v56 = vld [vmem:[%s1 + $0x18] sm:$0xff]
    %v57 = vld [vmem:[%s1 + $0x20] sm:$0xff]
    %v58 = vld [vmem:[%s1 + $0x28] sm:$0xff]
    %v59 = vld [vmem:[%s1 + $0x30] sm:$0xff]
    %v60 = vld [vmem:[%s1 + $0x38] sm:$0xff]
    %v61 = vld [vmem:[#allocation5] sm:$0xff]
    %v62 = vld [vmem:[#allocation5 + $0x8] sm:$0xff]
    %v63 = vld [vmem:[#allocation5 + $0x10] sm:$0xff]
    %v64 = vld [vmem:[#allocation5 + $0x18] sm:$0xff]
    %v65 = vld [vmem:[#allocation5 + $0x20] sm:$0xff]
    %v66 = vld [vmem:[#allocation5 + $0x28] sm:$0xff]
    %v67 = vld [vmem:[#allocation5 + $0x30] sm:$0xff]
    %v68 = vld [vmem:[#allocation5 + $0x38] sm:$0xff]
    %v69 = vld [vmem:[#allocation2] sm:$0xff]
    %v70 = vld [vmem:[#allocation2 + $0x8] sm:$0xff]
    %v71 = vld [vmem:[#allocation2 + $0x10] sm:$0xff]
    %v72 = vld [vmem:[#allocation2 + $0x18] sm:$0xff]
    %v73 = vld [vmem:[#allocation2 + $0x20] sm:$0xff]
    %v74 = vld [vmem:[#allocation2 + $0x28] sm:$0xff]
    %v75 = vld [vmem:[#allocation2 + $0x30] sm:$0xff]
    %v76 = vld [vmem:[#allocation2 + $0x38] sm:$0xff]
    %vm77 = vcmask 523264
    %v79 = vsel %vm77, %v53, 0
    %v82 = vsel %vm77, %v54, 0
    %v85 = vsel %vm77, %v55, 0
    %v88 = vsel %vm77, %v56, 0
    %v91 = vsel %vm77, %v57, 0
    %v94 = vsel %vm77, %v58, 0
    %v97 = vsel %vm77, %v59, 0
    %v100 = vsel %vm77, %v60, 0
    %102 = vmatpush.msra.mxu0 0.0
    %103 = vmatpush.msra.mxu0 0.0
    %104 = vmatpush.msra.mxu0 0.0
    %105 = vmatpush.msra.mxu0 0.0
    %106 = vmatpush.msra.mxu0 0.0
    %107 = vmatpush.msra.mxu0 0.0
    %108 = vmatpush.msra.mxu0 0.0
    %109 = vmatpush.msra.mxu0 0.0
    %110 = vmatpush.msra.mxu0 %v76
    %111 = vmatpush.msra.mxu0 %v75
    %112 = vmatpush.msra.mxu0 %v74
    %113 = vmatpush.msra.mxu0 %v73
    %114 = vmatpush.msra.mxu0 %v72
    %115 = vmatpush.msra.mxu0 %v71
    %116 = vmatpush.msra.mxu0 %v70
    %117 = vmatpush.msra.mxu0 %v69
    %118 = vmatmul.f32.gmra.mxu0 %v79
    %v119 = vpop.f32.mrf.mxu0
    %v120 = vadd.f32 0.0, %v119
    %121 = vmatmul.f32.gmra.mxu0 %v82
    %v122 = vpop.f32.mrf.mxu0
    %v123 = vadd.f32 0.0, %v122
    %124 = vmatmul.f32.gmra.mxu0 %v85
    %v125 = vpop.f32.mrf.mxu0
    %v126 = vadd.f32 0.0, %v125
    %127 = vmatmul.f32.gmra.mxu0 %v88
    %v128 = vpop.f32.mrf.mxu0
    %v129 = vadd.f32 0.0, %v128
    %130 = vmatmul.f32.gmra.mxu0 %v91
    %v131 = vpop.f32.mrf.mxu0
    %v132 = vadd.f32 0.0, %v131
    %133 = vmatmul.f32.gmra.mxu0 %v94
    %v134 = vpop.f32.mrf.mxu0
    %v135 = vadd.f32 0.0, %v134
    %136 = vmatmul.f32.gmra.mxu0 %v97
    %v137 = vpop.f32.mrf.mxu0
    %v138 = vadd.f32 0.0, %v137
    %139 = vmatmul.f32.gmra.mxu0 %v100
    %v140 = vpop.f32.mrf.mxu0
    %v141 = vadd.f32 0.0, %v140
    %142 = vdwg.mxu0
    %v144 = vsel %vm77, %v120, 0
    %v147 = vsel %vm77, %v123, 0
    %v150 = vsel %vm77, %v126, 0
    %v153 = vsel %vm77, %v129, 0
    %v156 = vsel %vm77, %v132, 0
    %v159 = vsel %vm77, %v135, 0
    %v162 = vsel %vm77, %v138, 0
    %v165 = vsel %vm77, %v141, 0
    %167 = vmatpush.msra.mxu0 0.0
    %168 = vmatpush.msra.mxu0 0.0
    %169 = vmatpush.msra.mxu0 0.0
    %170 = vmatpush.msra.mxu0 0.0
    %171 = vmatpush.msra.mxu0 0.0
    %172 = vmatpush.msra.mxu0 0.0
    %173 = vmatpush.msra.mxu0 0.0
    %174 = vmatpush.msra.mxu0 0.0
    %175 = vmatpush.msra.mxu0 %v68
    %176 = vmatpush.msra.mxu0 %v67
    %177 = vmatpush.msra.mxu0 %v66
    %178 = vmatpush.msra.mxu0 %v65
    %179 = vmatpush.msra.mxu0 %v64
    %180 = vmatpush.msra.mxu0 %v63
    %181 = vmatpush.msra.mxu0 %v62
    %182 = vmatpush.msra.mxu0 %v61
    %183 = vmatmul.f32.gmra.mxu0 %v144
    %v184 = vpop.f32.mrf.mxu0
    %v185 = vadd.f32 0.0, %v184
    %186 = vmatmul.f32.gmra.mxu0 %v147
    %v187 = vpop.f32.mrf.mxu0
    %v188 = vadd.f32 0.0, %v187
    %189 = vmatmul.f32.gmra.mxu0 %v150
    %v190 = vpop.f32.mrf.mxu0
    %v191 = vadd.f32 0.0, %v190
    %192 = vmatmul.f32.gmra.mxu0 %v153
    %v193 = vpop.f32.mrf.mxu0
    %v194 = vadd.f32 0.0, %v193
    %195 = vmatmul.f32.gmra.mxu0 %v156
    %v196 = vpop.f32.mrf.mxu0
    %v197 = vadd.f32 0.0, %v196
    %198 = vmatmul.f32.gmra.mxu0 %v159
    %v199 = vpop.f32.mrf.mxu0
    %v200 = vadd.f32 0.0, %v199
    %201 = vmatmul.f32.gmra.mxu0 %v162
    %v202 = vpop.f32.mrf.mxu0
    %v203 = vadd.f32 0.0, %v202
    %204 = vmatmul.f32.gmra.mxu0 %v165
    %v205 = vpop.f32.mrf.mxu0
    %v206 = vadd.f32 0.0, %v205
    %207 = vdwg.mxu0
    %s208 = scalar_lea.vmem [#allocation2], 64
    %v209 = vld [vmem:[%s208] sm:$0xff]
    %v210 = vld [vmem:[%s208 + $0x8] sm:$0xff]
    %v211 = vld [vmem:[%s208 + $0x10] sm:$0xff]
    %v212 = vld [vmem:[%s208 + $0x18] sm:$0xff]
    %v213 = vld [vmem:[%s208 + $0x20] sm:$0xff]
    %v214 = vld [vmem:[%s208 + $0x28] sm:$0xff]
    %v215 = vld [vmem:[%s208 + $0x30] sm:$0xff]
    %v216 = vld [vmem:[%s208 + $0x38] sm:$0xff]
    %217 = vmatpush.msra.mxu0 0.0
    %218 = vmatpush.msra.mxu0 0.0
    %219 = vmatpush.msra.mxu0 0.0
    %220 = vmatpush.msra.mxu0 0.0
    %221 = vmatpush.msra.mxu0 0.0
    %222 = vmatpush.msra.mxu0 0.0
    %223 = vmatpush.msra.mxu0 0.0
    %224 = vmatpush.msra.mxu0 0.0
    %225 = vmatpush.msra.mxu0 %v216
    %226 = vmatpush.msra.mxu0 %v215
    %227 = vmatpush.msra.mxu0 %v214
    %228 = vmatpush.msra.mxu0 %v213
    %229 = vmatpush.msra.mxu0 %v212
    %230 = vmatpush.msra.mxu0 %v211
    %231 = vmatpush.msra.mxu0 %v210
    %232 = vmatpush.msra.mxu0 %v209
    %233 = vmatmul.f32.gmra.mxu0 %v79
    %v234 = vpop.f32.mrf.mxu0
    %v235 = vadd.f32 0.0, %v234
    %236 = vmatmul.f32.gmra.mxu0 %v82
    %v237 = vpop.f32.mrf.mxu0
    %v238 = vadd.f32 0.0, %v237
    %239 = vmatmul.f32.gmra.mxu0 %v85
    %v240 = vpop.f32.mrf.mxu0
    %v241 = vadd.f32 0.0, %v240
    %242 = vmatmul.f32.gmra.mxu0 %v88
    %v243 = vpop.f32.mrf.mxu0
    %v244 = vadd.f32 0.0, %v243
    %245 = vmatmul.f32.gmra.mxu0 %v91
    %v246 = vpop.f32.mrf.mxu0
    %v247 = vadd.f32 0.0, %v246
    %248 = vmatmul.f32.gmra.mxu0 %v94
    %v249 = vpop.f32.mrf.mxu0
    %v250 = vadd.f32 0.0, %v249
    %251 = vmatmul.f32.gmra.mxu0 %v97
    %v252 = vpop.f32.mrf.mxu0
    %v253 = vadd.f32 0.0, %v252
    %254 = vmatmul.f32.gmra.mxu0 %v100
    %v255 = vpop.f32.mrf.mxu0
    %v256 = vadd.f32 0.0, %v255
    %257 = vdwg.mxu0
    %v259 = vsel %vm77, %v235, 0
    %v262 = vsel %vm77, %v238, 0
    %v265 = vsel %vm77, %v241, 0
    %v268 = vsel %vm77, %v244, 0
    %v271 = vsel %vm77, %v247, 0
    %v274 = vsel %vm77, %v250, 0
    %v277 = vsel %vm77, %v253, 0
    %v280 = vsel %vm77, %v256, 0
    %282 = vmatpush.msra.mxu0 0.0
    %283 = vmatpush.msra.mxu0 0.0
    %284 = vmatpush.msra.mxu0 0.0
    %285 = vmatpush.msra.mxu0 0.0
    %286 = vmatpush.msra.mxu0 0.0
    %287 = vmatpush.msra.mxu0 0.0
    %288 = vmatpush.msra.mxu0 0.0
    %289 = vmatpush.msra.mxu0 0.0
    %290 = vmatpush.msra.mxu0 %v68
    %291 = vmatpush.msra.mxu0 %v67
    %292 = vmatpush.msra.mxu0 %v66
    %293 = vmatpush.msra.mxu0 %v65
    %294 = vmatpush.msra.mxu0 %v64
    %295 = vmatpush.msra.mxu0 %v63
    %296 = vmatpush.msra.mxu0 %v62
    %297 = vmatpush.msra.mxu0 %v61
    %298 = vmatmul.f32.gmra.mxu0 %v259
    %v299 = vpop.f32.mrf.mxu0
    %v300 = vadd.f32 0.0, %v299
    %301 = vmatmul.f32.gmra.mxu0 %v262
    %v302 = vpop.f32.mrf.mxu0
    %v303 = vadd.f32 0.0, %v302
    %304 = vmatmul.f32.gmra.mxu0 %v265
    %v305 = vpop.f32.mrf.mxu0
    %v306 = vadd.f32 0.0, %v305
    %307 = vmatmul.f32.gmra.mxu0 %v268
    %v308 = vpop.f32.mrf.mxu0
    %v309 = vadd.f32 0.0, %v308
    %310 = vmatmul.f32.gmra.mxu0 %v271
    %v311 = vpop.f32.mrf.mxu0
    %v312 = vadd.f32 0.0, %v311
    %313 = vmatmul.f32.gmra.mxu0 %v274
    %v314 = vpop.f32.mrf.mxu0
    %v315 = vadd.f32 0.0, %v314
    %316 = vmatmul.f32.gmra.mxu0 %v277
    %v317 = vpop.f32.mrf.mxu0
    %v318 = vadd.f32 0.0, %v317
    %319 = vmatmul.f32.gmra.mxu0 %v280
    %v320 = vpop.f32.mrf.mxu0
    %v321 = vadd.f32 0.0, %v320
    %322 = vdwg.mxu0
    %v323 = vld [vmem:[%s3] sm:$0xff]
    %v324 = vld [vmem:[%s3 + $0x8] sm:$0xff]
    %v325 = vld [vmem:[%s3 + $0x10] sm:$0xff]
    %v326 = vld [vmem:[%s3 + $0x18] sm:$0xff]
    %v327 = vld [vmem:[%s3 + $0x20] sm:$0xff]
    %v328 = vld [vmem:[%s3 + $0x28] sm:$0xff]
    %v329 = vld [vmem:[%s3 + $0x30] sm:$0xff]
    %v330 = vld [vmem:[%s3 + $0x38] sm:$0xff]
    %v331 = vld [vmem:[%s4] sm:$0x1]
    %333 = vset.pattern.permute.xlu0 0
    %334 = vperm.xlu0 %333, %v323
    %v335 = vpop.permute.xlu0 %334
    %338 = vset.pattern.permute.xlu0 0
    %339 = vperm.xlu0 %338, %v324
    %v340 = vpop.permute.xlu0 %339
    %343 = vset.pattern.permute.xlu0 0
    %344 = vperm.xlu0 %343, %v325
    %v345 = vpop.permute.xlu0 %344
    %348 = vset.pattern.permute.xlu0 0
    %349 = vperm.xlu0 %348, %v326
    %v350 = vpop.permute.xlu0 %349
    %353 = vset.pattern.permute.xlu0 0
    %354 = vperm.xlu0 %353, %v327
    %v355 = vpop.permute.xlu0 %354
    %358 = vset.pattern.permute.xlu0 0
    %359 = vperm.xlu0 %358, %v328
    %v360 = vpop.permute.xlu0 %359
    %363 = vset.pattern.permute.xlu0 0
    %364 = vperm.xlu0 %363, %v329
    %v365 = vpop.permute.xlu0 %364
    %368 = vset.pattern.permute.xlu0 0
    %369 = vperm.xlu0 %368, %v330
    %v370 = vpop.permute.xlu0 %369
    %v372 = vperm.slane %v331, 0
    %v373 = vmul.f32 %v335, %v372
    %v374 = vmul.f32 %v340, %v372
    %v375 = vmul.f32 %v345, %v372
    %v376 = vmul.f32 %v350, %v372
    %v377 = vmul.f32 %v355, %v372
    %v378 = vmul.f32 %v360, %v372
    %v379 = vmul.f32 %v365, %v372
    %v380 = vmul.f32 %v370, %v372
    %v381 = vmax.f32 %v373, 0.0
    %v382 = vmax.f32 %v374, 0.0
    %v383 = vmax.f32 %v375, 0.0
    %v384 = vmax.f32 %v376, 0.0
    %v385 = vmax.f32 %v377, 0.0
    %v386 = vmax.f32 %v378, 0.0
    %v387 = vmax.f32 %v379, 0.0
    %v388 = vmax.f32 %v380, 0.0
    %v389 = vmin.f32 %v381, 1.0
    %v390 = vmin.f32 %v382, 1.0
    %v391 = vmin.f32 %v383, 1.0
    %v392 = vmin.f32 %v384, 1.0
    %v393 = vmin.f32 %v385, 1.0
    %v394 = vmin.f32 %v386, 1.0
    %v395 = vmin.f32 %v387, 1.0
    %v396 = vmin.f32 %v388, 1.0
    %v397 = vadd.f32 %v389, 0.0
    %v398 = vadd.f32 %v390, 0.0
    %v399 = vadd.f32 %v391, 0.0
    %v400 = vadd.f32 %v392, 0.0
    %v401 = vadd.f32 %v393, 0.0
    %v402 = vadd.f32 %v394, 0.0
    %v403 = vadd.f32 %v395, 0.0
    %v404 = vadd.f32 %v396, 0.0
    %v405 = vld [vmem:[%s4 + $0x1] sm:$0x1]
    %406 = vset.pattern.permute.xlu0 1
    %407 = vperm.xlu0 %406, %v323
    %v408 = vpop.permute.xlu0 %407
    %410 = vset.pattern.permute.xlu0 1
    %411 = vperm.xlu0 %410, %v324
    %v412 = vpop.permute.xlu0 %411
    %414 = vset.pattern.permute.xlu0 1
    %415 = vperm.xlu0 %414, %v325
    %v416 = vpop.permute.xlu0 %415
    %418 = vset.pattern.permute.xlu0 1
    %419 = vperm.xlu0 %418, %v326
    %v420 = vpop.permute.xlu0 %419
    %422 = vset.pattern.permute.xlu0 1
    %423 = vperm.xlu0 %422, %v327
    %v424 = vpop.permute.xlu0 %423
    %426 = vset.pattern.permute.xlu0 1
    %427 = vperm.xlu0 %426, %v328
    %v428 = vpop.permute.xlu0 %427
    %430 = vset.pattern.permute.xlu0 1
    %431 = vperm.xlu0 %430, %v329
    %v432 = vpop.permute.xlu0 %431
    %434 = vset.pattern.permute.xlu0 1
    %435 = vperm.xlu0 %434, %v330
    %v436 = vpop.permute.xlu0 %435
    %v438 = vperm.slane %v405, 0
    %v439 = vmul.f32 %v408, %v438
    %v440 = vmul.f32 %v412, %v438
    %v441 = vmul.f32 %v416, %v438
    %v442 = vmul.f32 %v420, %v438
    %v443 = vmul.f32 %v424, %v438
    %v444 = vmul.f32 %v428, %v438
    %v445 = vmul.f32 %v432, %v438
    %v446 = vmul.f32 %v436, %v438
    %v447 = vmax.f32 %v439, 0.0
    %v448 = vmax.f32 %v440, 0.0
    %v449 = vmax.f32 %v441, 0.0
    %v450 = vmax.f32 %v442, 0.0
    %v451 = vmax.f32 %v443, 0.0
    %v452 = vmax.f32 %v444, 0.0
    %v453 = vmax.f32 %v445, 0.0
    %v454 = vmax.f32 %v446, 0.0
    %v455 = vmin.f32 %v447, 1.0
    %v456 = vmin.f32 %v448, 1.0
    %v457 = vmin.f32 %v449, 1.0
    %v458 = vmin.f32 %v450, 1.0
    %v459 = vmin.f32 %v451, 1.0
    %v460 = vmin.f32 %v452, 1.0
    %v461 = vmin.f32 %v453, 1.0
    %v462 = vmin.f32 %v454, 1.0
    %v463 = vadd.f32 %v397, %v455
    %v464 = vadd.f32 %v398, %v456
    %v465 = vadd.f32 %v399, %v457
    %v466 = vadd.f32 %v400, %v458
    %v467 = vadd.f32 %v401, %v459
    %v468 = vadd.f32 %v402, %v460
    %v469 = vadd.f32 %v403, %v461
    %v470 = vadd.f32 %v404, %v462
    %v471 = vld [vmem:[%s4 + $0x2] sm:$0x1]
    %472 = vset.pattern.permute.xlu0 2
    %473 = vperm.xlu0 %472, %v323
    %v474 = vpop.permute.xlu0 %473
    %476 = vset.pattern.permute.xlu0 2
    %477 = vperm.xlu0 %476, %v324
    %v478 = vpop.permute.xlu0 %477
    %480 = vset.pattern.permute.xlu0 2
    %481 = vperm.xlu0 %480, %v325
    %v482 = vpop.permute.xlu0 %481
    %484 = vset.pattern.permute.xlu0 2
    %485 = vperm.xlu0 %484, %v326
    %v486 = vpop.permute.xlu0 %485
    %488 = vset.pattern.permute.xlu0 2
    %489 = vperm.xlu0 %488, %v327
    %v490 = vpop.permute.xlu0 %489
    %492 = vset.pattern.permute.xlu0 2
    %493 = vperm.xlu0 %492, %v328
    %v494 = vpop.permute.xlu0 %493
    %496 = vset.pattern.permute.xlu0 2
    %497 = vperm.xlu0 %496, %v329
    %v498 = vpop.permute.xlu0 %497
    %500 = vset.pattern.permute.xlu0 2
    %501 = vperm.xlu0 %500, %v330
    %v502 = vpop.permute.xlu0 %501
    %v504 = vperm.slane %v471, 0
    %v505 = vmul.f32 %v474, %v504
    %v506 = vmul.f32 %v478, %v504
    %v507 = vmul.f32 %v482, %v504
    %v508 = vmul.f32 %v486, %v504
    %v509 = vmul.f32 %v490, %v504
    %v510 = vmul.f32 %v494, %v504
    %v511 = vmul.f32 %v498, %v504
    %v512 = vmul.f32 %v502, %v504
    %v513 = vmax.f32 %v505, 0.0
    %v514 = vmax.f32 %v506, 0.0
    %v515 = vmax.f32 %v507, 0.0
    %v516 = vmax.f32 %v508, 0.0
    %v517 = vmax.f32 %v509, 0.0
    %v518 = vmax.f32 %v510, 0.0
    %v519 = vmax.f32 %v511, 0.0
    %v520 = vmax.f32 %v512, 0.0
    %v521 = vmin.f32 %v513, 1.0
    %v522 = vmin.f32 %v514, 1.0
    %v523 = vmin.f32 %v515, 1.0
    %v524 = vmin.f32 %v516, 1.0
    %v525 = vmin.f32 %v517, 1.0
    %v526 = vmin.f32 %v518, 1.0
    %v527 = vmin.f32 %v519, 1.0
    %v528 = vmin.f32 %v520, 1.0
    %v529 = vadd.f32 %v463, %v521
    %v530 = vadd.f32 %v464, %v522
    %v531 = vadd.f32 %v465, %v523
    %v532 = vadd.f32 %v466, %v524
    %v533 = vadd.f32 %v467, %v525
    %v534 = vadd.f32 %v468, %v526
    %v535 = vadd.f32 %v469, %v527
    %v536 = vadd.f32 %v470, %v528
    %v537 = vld [vmem:[%s4 + $0x3] sm:$0x1]
    %538 = vset.pattern.permute.xlu0 3
    %539 = vperm.xlu0 %538, %v323
    %v540 = vpop.permute.xlu0 %539
    %542 = vset.pattern.permute.xlu0 3
    %543 = vperm.xlu0 %542, %v324
    %v544 = vpop.permute.xlu0 %543
    %546 = vset.pattern.permute.xlu0 3
    %547 = vperm.xlu0 %546, %v325
    %v548 = vpop.permute.xlu0 %547
    %550 = vset.pattern.permute.xlu0 3
    %551 = vperm.xlu0 %550, %v326
    %v552 = vpop.permute.xlu0 %551
    %554 = vset.pattern.permute.xlu0 3
    %555 = vperm.xlu0 %554, %v327
    %v556 = vpop.permute.xlu0 %555
    %558 = vset.pattern.permute.xlu0 3
    %559 = vperm.xlu0 %558, %v328
    %v560 = vpop.permute.xlu0 %559
    %562 = vset.pattern.permute.xlu0 3
    %563 = vperm.xlu0 %562, %v329
    %v564 = vpop.permute.xlu0 %563
    %566 = vset.pattern.permute.xlu0 3
    %567 = vperm.xlu0 %566, %v330
    %v568 = vpop.permute.xlu0 %567
    %v570 = vperm.slane %v537, 0
    %v571 = vmul.f32 %v540, %v570
    %v572 = vmul.f32 %v544, %v570
    %v573 = vmul.f32 %v548, %v570
    %v574 = vmul.f32 %v552, %v570
    %v575 = vmul.f32 %v556, %v570
    %v576 = vmul.f32 %v560, %v570
    %v577 = vmul.f32 %v564, %v570
    %v578 = vmul.f32 %v568, %v570
    %v579 = vmax.f32 %v571, 0.0
    %v580 = vmax.f32 %v572, 0.0
    %v581 = vmax.f32 %v573, 0.0
    %v582 = vmax.f32 %v574, 0.0
    %v583 = vmax.f32 %v575, 0.0
    %v584 = vmax.f32 %v576, 0.0
    %v585 = vmax.f32 %v577, 0.0
    %v586 = vmax.f32 %v578, 0.0
    %v587 = vmin.f32 %v579, 1.0
    %v588 = vmin.f32 %v580, 1.0
    %v589 = vmin.f32 %v581, 1.0
    %v590 = vmin.f32 %v582, 1.0
    %v591 = vmin.f32 %v583, 1.0
    %v592 = vmin.f32 %v584, 1.0
    %v593 = vmin.f32 %v585, 1.0
    %v594 = vmin.f32 %v586, 1.0
    %v595 = vadd.f32 %v529, %v587
    %v596 = vadd.f32 %v530, %v588
    %v597 = vadd.f32 %v531, %v589
    %v598 = vadd.f32 %v532, %v590
    %v599 = vadd.f32 %v533, %v591
    %v600 = vadd.f32 %v534, %v592
    %v601 = vadd.f32 %v535, %v593
    %v602 = vadd.f32 %v536, %v594
    %v603 = vld [vmem:[%s4 + $0x4] sm:$0x1]
    %604 = vset.pattern.permute.xlu0 4
    %605 = vperm.xlu0 %604, %v323
    %v606 = vpop.permute.xlu0 %605
    %608 = vset.pattern.permute.xlu0 4
    %609 = vperm.xlu0 %608, %v324
    %v610 = vpop.permute.xlu0 %609
    %612 = vset.pattern.permute.xlu0 4
    %613 = vperm.xlu0 %612, %v325
    %v614 = vpop.permute.xlu0 %613
    %616 = vset.pattern.permute.xlu0 4
    %617 = vperm.xlu0 %616, %v326
    %v618 = vpop.permute.xlu0 %617
    %620 = vset.pattern.permute.xlu0 4
    %621 = vperm.xlu0 %620, %v327
    %v622 = vpop.permute.xlu0 %621
    %624 = vset.pattern.permute.xlu0 4
    %625 = vperm.xlu0 %624, %v328
    %v626 = vpop.permute.xlu0 %625
    %628 = vset.pattern.permute.xlu0 4
    %629 = vperm.xlu0 %628, %v329
    %v630 = vpop.permute.xlu0 %629
    %632 = vset.pattern.permute.xlu0 4
    %633 = vperm.xlu0 %632, %v330
    %v634 = vpop.permute.xlu0 %633
    %v636 = vperm.slane %v603, 0
    %v637 = vmul.f32 %v606, %v636
    %v638 = vmul.f32 %v610, %v636
    %v639 = vmul.f32 %v614, %v636
    %v640 = vmul.f32 %v618, %v636
    %v641 = vmul.f32 %v622, %v636
    %v642 = vmul.f32 %v626, %v636
    %v643 = vmul.f32 %v630, %v636
    %v644 = vmul.f32 %v634, %v636
    %v645 = vmax.f32 %v637, 0.0
    %v646 = vmax.f32 %v638, 0.0
    %v647 = vmax.f32 %v639, 0.0
    %v648 = vmax.f32 %v640, 0.0
    %v649 = vmax.f32 %v641, 0.0
    %v650 = vmax.f32 %v642, 0.0
    %v651 = vmax.f32 %v643, 0.0
    %v652 = vmax.f32 %v644, 0.0
    %v653 = vmin.f32 %v645, 1.0
    %v654 = vmin.f32 %v646, 1.0
    %v655 = vmin.f32 %v647, 1.0
    %v656 = vmin.f32 %v648, 1.0
    %v657 = vmin.f32 %v649, 1.0
    %v658 = vmin.f32 %v650, 1.0
    %v659 = vmin.f32 %v651, 1.0
    %v660 = vmin.f32 %v652, 1.0
    %v661 = vadd.f32 %v595, %v653
    %v662 = vadd.f32 %v596, %v654
    %v663 = vadd.f32 %v597, %v655
    %v664 = vadd.f32 %v598, %v656
    %v665 = vadd.f32 %v599, %v657
    %v666 = vadd.f32 %v600, %v658
    %v667 = vadd.f32 %v601, %v659
    %v668 = vadd.f32 %v602, %v660
    %v669 = vld [vmem:[%s4 + $0x5] sm:$0x1]
    %670 = vset.pattern.permute.xlu0 5
    %671 = vperm.xlu0 %670, %v323
    %v672 = vpop.permute.xlu0 %671
    %674 = vset.pattern.permute.xlu0 5
    %675 = vperm.xlu0 %674, %v324
    %v676 = vpop.permute.xlu0 %675
    %678 = vset.pattern.permute.xlu0 5
    %679 = vperm.xlu0 %678, %v325
    %v680 = vpop.permute.xlu0 %679
    %682 = vset.pattern.permute.xlu0 5
    %683 = vperm.xlu0 %682, %v326
    %v684 = vpop.permute.xlu0 %683
    %686 = vset.pattern.permute.xlu0 5
    %687 = vperm.xlu0 %686, %v327
    %v688 = vpop.permute.xlu0 %687
    %690 = vset.pattern.permute.xlu0 5
    %691 = vperm.xlu0 %690, %v328
    %v692 = vpop.permute.xlu0 %691
    %694 = vset.pattern.permute.xlu0 5
    %695 = vperm.xlu0 %694, %v329
    %v696 = vpop.permute.xlu0 %695
    %698 = vset.pattern.permute.xlu0 5
    %699 = vperm.xlu0 %698, %v330
    %v700 = vpop.permute.xlu0 %699
    %v702 = vperm.slane %v669, 0
    %v703 = vmul.f32 %v672, %v702
    %v704 = vmul.f32 %v676, %v702
    %v705 = vmul.f32 %v680, %v702
    %v706 = vmul.f32 %v684, %v702
    %v707 = vmul.f32 %v688, %v702
    %v708 = vmul.f32 %v692, %v702
    %v709 = vmul.f32 %v696, %v702
    %v710 = vmul.f32 %v700, %v702
    %v711 = vmax.f32 %v703, 0.0
    %v712 = vmax.f32 %v704, 0.0
    %v713 = vmax.f32 %v705, 0.0
    %v714 = vmax.f32 %v706, 0.0
    %v715 = vmax.f32 %v707, 0.0
    %v716 = vmax.f32 %v708, 0.0
    %v717 = vmax.f32 %v709, 0.0
    %v718 = vmax.f32 %v710, 0.0
    %v719 = vmin.f32 %v711, 1.0
    %v720 = vmin.f32 %v712, 1.0
    %v721 = vmin.f32 %v713, 1.0
    %v722 = vmin.f32 %v714, 1.0
    %v723 = vmin.f32 %v715, 1.0
    %v724 = vmin.f32 %v716, 1.0
    %v725 = vmin.f32 %v717, 1.0
    %v726 = vmin.f32 %v718, 1.0
    %v727 = vadd.f32 %v661, %v719
    %v728 = vadd.f32 %v662, %v720
    %v729 = vadd.f32 %v663, %v721
    %v730 = vadd.f32 %v664, %v722
    %v731 = vadd.f32 %v665, %v723
    %v732 = vadd.f32 %v666, %v724
    %v733 = vadd.f32 %v667, %v725
    %v734 = vadd.f32 %v668, %v726
    %v735 = vld [vmem:[%s4 + $0x6] sm:$0x1]
    %736 = vset.pattern.permute.xlu0 6
    %737 = vperm.xlu0 %736, %v323
    %v738 = vpop.permute.xlu0 %737
    %740 = vset.pattern.permute.xlu0 6
    %741 = vperm.xlu0 %740, %v324
    %v742 = vpop.permute.xlu0 %741
    %744 = vset.pattern.permute.xlu0 6
    %745 = vperm.xlu0 %744, %v325
    %v746 = vpop.permute.xlu0 %745
    %748 = vset.pattern.permute.xlu0 6
    %749 = vperm.xlu0 %748, %v326
    %v750 = vpop.permute.xlu0 %749
    %752 = vset.pattern.permute.xlu0 6
    %753 = vperm.xlu0 %752, %v327
    %v754 = vpop.permute.xlu0 %753
    %756 = vset.pattern.permute.xlu0 6
    %757 = vperm.xlu0 %756, %v328
    %v758 = vpop.permute.xlu0 %757
    %760 = vset.pattern.permute.xlu0 6
    %761 = vperm.xlu0 %760, %v329
    %v762 = vpop.permute.xlu0 %761
    %764 = vset.pattern.permute.xlu0 6
    %765 = vperm.xlu0 %764, %v330
    %v766 = vpop.permute.xlu0 %765
    %v768 = vperm.slane %v735, 0
    %v769 = vmul.f32 %v738, %v768
    %v770 = vmul.f32 %v742, %v768
    %v771 = vmul.f32 %v746, %v768
    %v772 = vmul.f32 %v750, %v768
    %v773 = vmul.f32 %v754, %v768
    %v774 = vmul.f32 %v758, %v768
    %v775 = vmul.f32 %v762, %v768
    %v776 = vmul.f32 %v766, %v768
    %v777 = vmax.f32 %v769, 0.0
    %v778 = vmax.f32 %v770, 0.0
    %v779 = vmax.f32 %v771, 0.0
    %v780 = vmax.f32 %v772, 0.0
    %v781 = vmax.f32 %v773, 0.0
    %v782 = vmax.f32 %v774, 0.0
    %v783 = vmax.f32 %v775, 0.0
    %v784 = vmax.f32 %v776, 0.0
    %v785 = vmin.f32 %v777, 1.0
    %v786 = vmin.f32 %v778, 1.0
    %v787 = vmin.f32 %v779, 1.0
    %v788 = vmin.f32 %v780, 1.0
    %v789 = vmin.f32 %v781, 1.0
    %v790 = vmin.f32 %v782, 1.0
    %v791 = vmin.f32 %v783, 1.0
    %v792 = vmin.f32 %v784, 1.0
    %v793 = vadd.f32 %v727, %v785
    %v794 = vadd.f32 %v728, %v786
    %v795 = vadd.f32 %v729, %v787
    %v796 = vadd.f32 %v730, %v788
    %v797 = vadd.f32 %v731, %v789
    %v798 = vadd.f32 %v732, %v790
    %v799 = vadd.f32 %v733, %v791
    %v800 = vadd.f32 %v734, %v792
    %v801 = vld [vmem:[%s4 + $0x7] sm:$0x1]
    %802 = vset.pattern.permute.xlu0 7
    %803 = vperm.xlu0 %802, %v323
    %v804 = vpop.permute.xlu0 %803
    %806 = vset.pattern.permute.xlu0 7
    %807 = vperm.xlu0 %806, %v324
    %v808 = vpop.permute.xlu0 %807
    %810 = vset.pattern.permute.xlu0 7
    %811 = vperm.xlu0 %810, %v325
    %v812 = vpop.permute.xlu0 %811
    %814 = vset.pattern.permute.xlu0 7
    %815 = vperm.xlu0 %814, %v326
    %v816 = vpop.permute.xlu0 %815
    %818 = vset.pattern.permute.xlu0 7
    %819 = vperm.xlu0 %818, %v327
    %v820 = vpop.permute.xlu0 %819
    %822 = vset.pattern.permute.xlu0 7
    %823 = vperm.xlu0 %822, %v328
    %v824 = vpop.permute.xlu0 %823
    %826 = vset.pattern.permute.xlu0 7
    %827 = vperm.xlu0 %826, %v329
    %v828 = vpop.permute.xlu0 %827
    %830 = vset.pattern.permute.xlu0 7
    %831 = vperm.xlu0 %830, %v330
    %v832 = vpop.permute.xlu0 %831
    %v834 = vperm.slane %v801, 0
    %v835 = vmul.f32 %v804, %v834
    %v836 = vmul.f32 %v808, %v834
    %v837 = vmul.f32 %v812, %v834
    %v838 = vmul.f32 %v816, %v834
    %v839 = vmul.f32 %v820, %v834
    %v840 = vmul.f32 %v824, %v834
    %v841 = vmul.f32 %v828, %v834
    %v842 = vmul.f32 %v832, %v834
    %v843 = vmax.f32 %v835, 0.0
    %v844 = vmax.f32 %v836, 0.0
    %v845 = vmax.f32 %v837, 0.0
    %v846 = vmax.f32 %v838, 0.0
    %v847 = vmax.f32 %v839, 0.0
    %v848 = vmax.f32 %v840, 0.0
    %v849 = vmax.f32 %v841, 0.0
    %v850 = vmax.f32 %v842, 0.0
    %v851 = vmin.f32 %v843, 1.0
    %v852 = vmin.f32 %v844, 1.0
    %v853 = vmin.f32 %v845, 1.0
    %v854 = vmin.f32 %v846, 1.0
    %v855 = vmin.f32 %v847, 1.0
    %v856 = vmin.f32 %v848, 1.0
    %v857 = vmin.f32 %v849, 1.0
    %v858 = vmin.f32 %v850, 1.0
    %v859 = vadd.f32 %v793, %v851
    %v860 = vadd.f32 %v794, %v852
    %v861 = vadd.f32 %v795, %v853
    %v862 = vadd.f32 %v796, %v854
    %v863 = vadd.f32 %v797, %v855
    %v864 = vadd.f32 %v798, %v856
    %v865 = vadd.f32 %v799, %v857
    %v866 = vadd.f32 %v800, %v858
    %v867 = vld [vmem:[%s4 + $0x8] sm:$0x1]
    %868 = vset.pattern.permute.xlu0 8
    %869 = vperm.xlu0 %868, %v323
    %v870 = vpop.permute.xlu0 %869
    %872 = vset.pattern.permute.xlu0 8
    %873 = vperm.xlu0 %872, %v324
    %v874 = vpop.permute.xlu0 %873
    %876 = vset.pattern.permute.xlu0 8
    %877 = vperm.xlu0 %876, %v325
    %v878 = vpop.permute.xlu0 %877
    %880 = vset.pattern.permute.xlu0 8
    %881 = vperm.xlu0 %880, %v326
    %v882 = vpop.permute.xlu0 %881
    %884 = vset.pattern.permute.xlu0 8
    %885 = vperm.xlu0 %884, %v327
    %v886 = vpop.permute.xlu0 %885
    %888 = vset.pattern.permute.xlu0 8
    %889 = vperm.xlu0 %888, %v328
    %v890 = vpop.permute.xlu0 %889
    %892 = vset.pattern.permute.xlu0 8
    %893 = vperm.xlu0 %892, %v329
    %v894 = vpop.permute.xlu0 %893
    %896 = vset.pattern.permute.xlu0 8
    %897 = vperm.xlu0 %896, %v330
    %v898 = vpop.permute.xlu0 %897
    %v900 = vperm.slane %v867, 0
    %v901 = vmul.f32 %v870, %v900
    %v902 = vmul.f32 %v874, %v900
    %v903 = vmul.f32 %v878, %v900
    %v904 = vmul.f32 %v882, %v900
    %v905 = vmul.f32 %v886, %v900
    %v906 = vmul.f32 %v890, %v900
    %v907 = vmul.f32 %v894, %v900
    %v908 = vmul.f32 %v898, %v900
    %v909 = vmax.f32 %v901, 0.0
    %v910 = vmax.f32 %v902, 0.0
    %v911 = vmax.f32 %v903, 0.0
    %v912 = vmax.f32 %v904, 0.0
    %v913 = vmax.f32 %v905, 0.0
    %v914 = vmax.f32 %v906, 0.0
    %v915 = vmax.f32 %v907, 0.0
    %v916 = vmax.f32 %v908, 0.0
    %v917 = vmin.f32 %v909, 1.0
    %v918 = vmin.f32 %v910, 1.0
    %v919 = vmin.f32 %v911, 1.0
    %v920 = vmin.f32 %v912, 1.0
    %v921 = vmin.f32 %v913, 1.0
    %v922 = vmin.f32 %v914, 1.0
    %v923 = vmin.f32 %v915, 1.0
    %v924 = vmin.f32 %v916, 1.0
    %v925 = vadd.f32 %v859, %v917
    %v926 = vadd.f32 %v860, %v918
    %v927 = vadd.f32 %v861, %v919
    %v928 = vadd.f32 %v862, %v920
    %v929 = vadd.f32 %v863, %v921
    %v930 = vadd.f32 %v864, %v922
    %v931 = vadd.f32 %v865, %v923
    %v932 = vadd.f32 %v866, %v924
    %v933 = vld [vmem:[%s4 + $0x9] sm:$0x1]
    %934 = vset.pattern.permute.xlu0 9
    %935 = vperm.xlu0 %934, %v323
    %v936 = vpop.permute.xlu0 %935
    %938 = vset.pattern.permute.xlu0 9
    %939 = vperm.xlu0 %938, %v324
    %v940 = vpop.permute.xlu0 %939
    %942 = vset.pattern.permute.xlu0 9
    %943 = vperm.xlu0 %942, %v325
    %v944 = vpop.permute.xlu0 %943
    %946 = vset.pattern.permute.xlu0 9
    %947 = vperm.xlu0 %946, %v326
    %v948 = vpop.permute.xlu0 %947
    %950 = vset.pattern.permute.xlu0 9
    %951 = vperm.xlu0 %950, %v327
    %v952 = vpop.permute.xlu0 %951
    %954 = vset.pattern.permute.xlu0 9
    %955 = vperm.xlu0 %954, %v328
    %v956 = vpop.permute.xlu0 %955
    %958 = vset.pattern.permute.xlu0 9
    %959 = vperm.xlu0 %958, %v329
    %v960 = vpop.permute.xlu0 %959
    %962 = vset.pattern.permute.xlu0 9
    %963 = vperm.xlu0 %962, %v330
    %v964 = vpop.permute.xlu0 %963
    %v966 = vperm.slane %v933, 0
    %v967 = vmul.f32 %v936, %v966
    %v968 = vmul.f32 %v940, %v966
    %v969 = vmul.f32 %v944, %v966
    %v970 = vmul.f32 %v948, %v966
    %v971 = vmul.f32 %v952, %v966
    %v972 = vmul.f32 %v956, %v966
    %v973 = vmul.f32 %v960, %v966
    %v974 = vmul.f32 %v964, %v966
    %v975 = vmax.f32 %v967, 0.0
    %v976 = vmax.f32 %v968, 0.0
    %v977 = vmax.f32 %v969, 0.0
    %v978 = vmax.f32 %v970, 0.0
    %v979 = vmax.f32 %v971, 0.0
    %v980 = vmax.f32 %v972, 0.0
    %v981 = vmax.f32 %v973, 0.0
    %v982 = vmax.f32 %v974, 0.0
    %v983 = vmin.f32 %v975, 1.0
    %v984 = vmin.f32 %v976, 1.0
    %v985 = vmin.f32 %v977, 1.0
    %v986 = vmin.f32 %v978, 1.0
    %v987 = vmin.f32 %v979, 1.0
    %v988 = vmin.f32 %v980, 1.0
    %v989 = vmin.f32 %v981, 1.0
    %v990 = vmin.f32 %v982, 1.0
    %v991 = vadd.f32 %v925, %v983
    %v992 = vadd.f32 %v926, %v984
    %v993 = vadd.f32 %v927, %v985
    %v994 = vadd.f32 %v928, %v986
    %v995 = vadd.f32 %v929, %v987
    %v996 = vadd.f32 %v930, %v988
    %v997 = vadd.f32 %v931, %v989
    %v998 = vadd.f32 %v932, %v990
    %v999 = vld [vmem:[%s4 + $0xa] sm:$0x1]
    %1000 = vset.pattern.permute.xlu0 10
    %1001 = vperm.xlu0 %1000, %v323
    %v1002 = vpop.permute.xlu0 %1001
    %1004 = vset.pattern.permute.xlu0 10
    %1005 = vperm.xlu0 %1004, %v324
    %v1006 = vpop.permute.xlu0 %1005
    %1008 = vset.pattern.permute.xlu0 10
    %1009 = vperm.xlu0 %1008, %v325
    %v1010 = vpop.permute.xlu0 %1009
    %1012 = vset.pattern.permute.xlu0 10
    %1013 = vperm.xlu0 %1012, %v326
    %v1014 = vpop.permute.xlu0 %1013
    %1016 = vset.pattern.permute.xlu0 10
    %1017 = vperm.xlu0 %1016, %v327
    %v1018 = vpop.permute.xlu0 %1017
    %1020 = vset.pattern.permute.xlu0 10
    %1021 = vperm.xlu0 %1020, %v328
    %v1022 = vpop.permute.xlu0 %1021
    %1024 = vset.pattern.permute.xlu0 10
    %1025 = vperm.xlu0 %1024, %v329
    %v1026 = vpop.permute.xlu0 %1025
    %1028 = vset.pattern.permute.xlu0 10
    %1029 = vperm.xlu0 %1028, %v330
    %v1030 = vpop.permute.xlu0 %1029
    %v1032 = vperm.slane %v999, 0
    %v1033 = vmul.f32 %v1002, %v1032
    %v1034 = vmul.f32 %v1006, %v1032
    %v1035 = vmul.f32 %v1010, %v1032
    %v1036 = vmul.f32 %v1014, %v1032
    %v1037 = vmul.f32 %v1018, %v1032
    %v1038 = vmul.f32 %v1022, %v1032
    %v1039 = vmul.f32 %v1026, %v1032
    %v1040 = vmul.f32 %v1030, %v1032
    %v1041 = vmax.f32 %v1033, 0.0
    %v1042 = vmax.f32 %v1034, 0.0
    %v1043 = vmax.f32 %v1035, 0.0
    %v1044 = vmax.f32 %v1036, 0.0
    %v1045 = vmax.f32 %v1037, 0.0
    %v1046 = vmax.f32 %v1038, 0.0
    %v1047 = vmax.f32 %v1039, 0.0
    %v1048 = vmax.f32 %v1040, 0.0
    %v1049 = vmin.f32 %v1041, 1.0
    %v1050 = vmin.f32 %v1042, 1.0
    %v1051 = vmin.f32 %v1043, 1.0
    %v1052 = vmin.f32 %v1044, 1.0
    %v1053 = vmin.f32 %v1045, 1.0
    %v1054 = vmin.f32 %v1046, 1.0
    %v1055 = vmin.f32 %v1047, 1.0
    %v1056 = vmin.f32 %v1048, 1.0
    %v1057 = vadd.f32 %v991, %v1049
    %v1058 = vadd.f32 %v992, %v1050
    %v1059 = vadd.f32 %v993, %v1051
    %v1060 = vadd.f32 %v994, %v1052
    %v1061 = vadd.f32 %v995, %v1053
    %v1062 = vadd.f32 %v996, %v1054
    %v1063 = vadd.f32 %v997, %v1055
    %v1064 = vadd.f32 %v998, %v1056
    %v1065 = vmax.f32 %v1057, 0.0
    %v1066 = vmax.f32 %v1058, 0.0
    %v1067 = vmax.f32 %v1059, 0.0
    %v1068 = vmax.f32 %v1060, 0.0
    %v1069 = vmax.f32 %v1061, 0.0
    %v1070 = vmax.f32 %v1062, 0.0
    %v1071 = vmax.f32 %v1063, 0.0
    %v1072 = vmax.f32 %v1064, 0.0
    %v1073 = vmin.f32 %v1065, 1.0
    %v1074 = vmin.f32 %v1066, 1.0
    %v1075 = vmin.f32 %v1067, 1.0
    %v1076 = vmin.f32 %v1068, 1.0
    %v1077 = vmin.f32 %v1069, 1.0
    %v1078 = vmin.f32 %v1070, 1.0
    %v1079 = vmin.f32 %v1071, 1.0
    %v1080 = vmin.f32 %v1072, 1.0
    %v1081 = vmul.f32 %v185, %v1073
    %v1082 = vmul.f32 %v188, %v1074
    %v1083 = vmul.f32 %v191, %v1075
    %v1084 = vmul.f32 %v194, %v1076
    %v1085 = vmul.f32 %v197, %v1077
    %v1086 = vmul.f32 %v200, %v1078
    %v1087 = vmul.f32 %v203, %v1079
    %v1088 = vmul.f32 %v206, %v1080
    %1089 = vst.msk [vmem:[#allocation7] sm:$0xff] %vm77, %v1081
    %1090 = vst.msk [vmem:[#allocation7 + $0x8] sm:$0xff] %vm77, %v1082
    %1091 = vst.msk [vmem:[#allocation7 + $0x10] sm:$0xff] %vm77, %v1083
    %1092 = vst.msk [vmem:[#allocation7 + $0x18] sm:$0xff] %vm77, %v1084
    %1093 = vst.msk [vmem:[#allocation7 + $0x20] sm:$0xff] %vm77, %v1085
    %1094 = vst.msk [vmem:[#allocation7 + $0x28] sm:$0xff] %vm77, %v1086
    %1095 = vst.msk [vmem:[#allocation7 + $0x30] sm:$0xff] %vm77, %v1087
    %1096 = vst.msk [vmem:[#allocation7 + $0x38] sm:$0xff] %vm77, %v1088
    %v1097 = vmul.f32 %v300, %v1073
    %v1098 = vmul.f32 %v303, %v1074
    %v1099 = vmul.f32 %v306, %v1075
    %v1100 = vmul.f32 %v309, %v1076
    %v1101 = vmul.f32 %v312, %v1077
    %v1102 = vmul.f32 %v315, %v1078
    %v1103 = vmul.f32 %v318, %v1079
    %v1104 = vmul.f32 %v321, %v1080
    %s1105 = scalar_lea.vmem [#allocation7], 64
    %1106 = vst.msk [vmem:[%s1105] sm:$0xff] %vm77, %v1097
    %1107 = vst.msk [vmem:[%s1105 + $0x8] sm:$0xff] %vm77, %v1098
    %1108 = vst.msk [vmem:[%s1105 + $0x10] sm:$0xff] %vm77, %v1099
    %1109 = vst.msk [vmem:[%s1105 + $0x18] sm:$0xff] %vm77, %v1100
    %1110 = vst.msk [vmem:[%s1105 + $0x20] sm:$0xff] %vm77, %v1101
    %1111 = vst.msk [vmem:[%s1105 + $0x28] sm:$0xff] %vm77, %v1102
    %1112 = vst.msk [vmem:[%s1105 + $0x30] sm:$0xff] %vm77, %v1103
    %1113 = vst.msk [vmem:[%s1105 + $0x38] sm:$0xff] %vm77, %v1104
    // Predicated region
    $region30: #{tpu_custom_call.1} parent=1 // pred_check
      _
    $region31: #{tpu_custom_call.1} parent=1 // pred_check_branch
      %1115 = sbr.rel (0) target = $region33
    $region32: #{tpu_custom_call.1} parent=1 // pred_region
      %1117 = vsyncadd [#allocation4], 0
      %s1118 = sshll.u32 [#allocation7], 4
      %s1119 = int_to_ptr.vmem [resolvable:$true] %s1118
      %s1120 = sshll.u32 %s5, 4
      %s1121 = int_to_ptr.hbm [resolvable:$true] %s1120
      %1126 = dma.vmem_to_hbm [thread:$0]  %s1119, 2048, %s1121, [#allocation4], 128, 128, 8
    $region33: #{tpu_custom_call.1} parent=1 // pred_fallthru
      _
    // Predicated region
    $region34: #{tpu_custom_call.1} parent=1 // pred_check
      _
    $region35: #{tpu_custom_call.1} parent=1 // pred_check_branch
      %1128 = sbr.rel (0) target = $region37
    $region36: #{tpu_custom_call.1} parent=1 // pred_region
      %1130 = dma.done [#allocation4], 2048
    $region37: #{tpu_custom_call.1} parent=1 // pred_fallthru
      _
    %1131 = vsyncpa [#allocation3], 1
    %1132 = vsyncpa [#allocation6], 1
    %1133 = vsyncpa [#allocation4], 1

</llo_original>
